<compile_context>
chip_gen: v6e
topology: v6e:2x2x1
jax: 0.10.0
libtpu: 0.0.40
codegen_flags: <defaults>
</compile_context>

<pallas_src>
import jax
import jax.numpy as jnp
from jax.experimental import pallas as pl
from jax.experimental.pallas import tpu as pltpu

_LANE = 128                              # vreg lane count
_SUBLANE = 8                             # vreg sublane count
_MAX_LANE_WIDTH = 4096                   # lane-dense last-dim cap
_TARGET_BLOCK_BYTES = 4 * 1024 * 1024    # ~4 MiB per block
_VMEM_LIMIT_BYTES = 32 * 1024 * 1024     # safe on all generations


def relu_kernel(x_ref, o_ref):
    # Elementwise ReLU on the VPU; `0` is weak-typed so bf16 stays bf16.
    o_ref[...] = jnp.maximum(x_ref[...], 0)


def _pick_width(n: int):
    """Widest multiple of 128 (<= cap) that divides n, else None."""
    cap = min(n, _MAX_LANE_WIDTH)
    for w in range(cap - cap % _LANE, 0, -_LANE):
        if n % w == 0:
            return w
    return None


def _pick_block_rows(rows: int, width: int, itemsize: int) -> int:
    """Rows per block targeting ~4 MiB; multiple of 8 or the full row extent."""
    target = max(1, _TARGET_BLOCK_BYTES // (width * itemsize))
    if rows <= target:
        return rows                      # single block == full second-to-last dim
    block = (target // _SUBLANE) * _SUBLANE
    return max(block, _SUBLANE)


def _relu_pallas_2d(x2d: jax.Array) -> jax.Array:
    rows, width = x2d.shape
    itemsize = jnp.dtype(x2d.dtype).itemsize
    block_rows = _pick_block_rows(rows, width, itemsize)
    grid = (pl.cdiv(rows, block_rows),)   # partial last block handled by Pallas
    nbytes = rows * width * itemsize
    return pl.pallas_call(
        relu_kernel,
        out_shape=jax.ShapeDtypeStruct((rows, width), x2d.dtype),
        grid_spec=pltpu.PrefetchScalarGridSpec(
            num_scalar_prefetch=0,
            grid=grid,
            in_specs=[pl.BlockSpec((block_rows, width), lambda i: (i, 0))],
            out_specs=pl.BlockSpec((block_rows, width), lambda i: (i, 0)),
        ),
        compiler_params=pltpu.CompilerParams(
            dimension_semantics=("parallel",),
            vmem_limit_bytes=_VMEM_LIMIT_BYTES,
        ),
        cost_estimate=pl.CostEstimate(
            flops=rows * width,
            transcendentals=0,
            bytes_accessed=2 * nbytes,
        ),
    )(x2d)


@jax.jit
def pallas_relu(x: jax.Array) -> jax.Array:
    """Elementwise ReLU via a Pallas TPU kernel (forward of the PyTorch Model)."""
    orig_shape = x.shape
    n = x.size
    if n == 0:
        return x

    width = _pick_width(n)
    if width is not None:
        # Zero-copy path: free reshape of the contiguous buffer into a
        # lane-dense slab, no padding, no post-slice.
        x2d = x.reshape(n // width, width)
        return _relu_pallas_2d(x2d).reshape(orig_shape)

    # TODO(synk): ragged sizes (element count not a multiple of 128) fall back
    # to a pad + slice pass; could instead be masked in-kernel on a 1-D view.
    pad_width = _SUBLANE * _LANE  # 1024-wide lane-dense slab
    padded = pl.cdiv(n, pad_width) * pad_width
    flat = jnp.pad(x.reshape(-1), (0, padded - n))
    out2d = _relu_pallas_2d(flat.reshape(padded // pad_width, pad_width))
    return out2d.reshape(-1)[:n].reshape(orig_shape)


if __name__ == "__main__":
    key = jax.random.PRNGKey(0)
    # Small NCHW input consistent with the module's elementwise forward.
    x = jax.random.normal(key, (2, 4, 16, 16), dtype=jnp.float32)

    y = jax.block_until_ready(pallas_relu(x))

    # Correctness check against the reference (torch ReLU == max(x, 0)).
    y_ref = jnp.maximum(x, 0.0)
    assert y.shape == x.shape and y.dtype == x.dtype
    assert jnp.allclose(y, y_ref), "mismatch vs reference ReLU"

    print("KERNEL_OK")
</pallas_src>

<mosaic_0001>
module attributes {stable_mosaic.version = 11 : i64} {
  func.func @relu_kernel(%arg0: i32, %arg1: memref<1x2048xf32, #tpu.memory_space<vmem>>, %arg2: memref<1x2048xf32, #tpu.memory_space<vmem>>) attributes {dimension_semantics = [#tpu.dimension_semantics<parallel>], iteration_bounds = array<i64: 1>, scalar_prefetch = 0 : i64, scratch_operands = 0 : i64, tpu.core_type = #tpu.core_type<tc>, window_params = [{transform_indices = @transform_0, window_bounds = array<i64: 1, 2048>}, {transform_indices = @transform_1, window_bounds = array<i64: 1, 2048>}]} {
    %c0 = arith.constant 0 : index
    %c0_0 = arith.constant 0 : index
    %0 = vector.load %arg1[%c0, %c0_0] : memref<1x2048xf32, #tpu.memory_space<vmem>>, vector<1x2048xf32>
    %cst = arith.constant 0.000000e+00 : f32
    %1 = vector.broadcast %cst : f32 to vector<1x2048xf32>
    %2 = arith.maximumf %0, %1 : vector<1x2048xf32>
    %c0_1 = arith.constant 0 : index
    %c0_2 = arith.constant 0 : index
    %3 = vector.load %arg2[%c0_1, %c0_2] : memref<1x2048xf32, #tpu.memory_space<vmem>>, vector<1x2048xf32>
    tpu.vector_store %arg2[%c0_1, %c0_2], %2 {strides = array<i32>} : memref<1x2048xf32, #tpu.memory_space<vmem>>, vector<1x2048xf32>,
    return
  }
  func.func @transform_0(%arg0: i32) -> (i32, i32) {
    %c0_i32 = arith.constant 0 : i32
    %c0_i32_0 = arith.constant 0 : i32
    return %arg0, %c0_i32 : i32, i32
  }
  func.func @transform_1(%arg0: i32) -> (i32, i32) {
    %c0_i32 = arith.constant 0 : i32
    %c0_i32_0 = arith.constant 0 : i32
    return %arg0, %c0_i32 : i32, i32
  }
}

</mosaic_0001>

<llo_original>
// kernel: pallas_relu.1
$region0: #{pallas_relu.1}
  #allocation0 [shape = 'u32[]', space=smem, size = 0x4, offset = 0x4, fixed_abs, tag = 'smem constant byte address 0x4 - core index']
  #allocation1 [shape = 'u32[144,128]{1,0:T(1,128)}', space=vmem, size = 0x12000, scoped, tag = 'internal scratch']
  %s0 = inlined_call_operand.vmem [shape: f32[1,2048], index: 0, kind: input, shape index: {}]
  %s1 = inlined_call_operand.vmem [shape: f32[1,2048], index: 1, kind: output, shape index: {}]
  %s2 = sld [smem:[#allocation0]]
  $region14: #{pallas_relu.1} parent=0
    _
  %s4 = ssub.s32 1, %s2
  %s5 = scalar_select 0, %s4, %s2
  // Predicated region
  $region2: #{pallas_relu.1} parent=0 // pred_check
    _
  $region3: #{pallas_relu.1} parent=0 // pred_check_branch
    %7 = sbr.rel (0) target = $region5
  $region4: #{pallas_relu.1} parent=0 // pred_region
    _
  $region5: #{pallas_relu.1} parent=0 // pred_fallthru
    _
  %v8 = vld [vmem:[%s0] sm:$0xff]
  %v9 = vld [vmem:[%s0 + $0x8] sm:$0xff]
  %v10 = vmax.f32 %v8, 0.0
  %v11 = vmax.f32 %v9, 0.0
  %12 = vst [vmem:[%s1] sm:$0xff] %v10
  %13 = vst [vmem:[%s1 + $0x8] sm:$0xff] %v11
  // Predicated region
  $region6: #{pallas_relu.1} parent=0 // pred_check
    _
  $region7: #{pallas_relu.1} parent=0 // pred_check_branch
    %15 = sbr.rel (0) target = $region9
  $region8: #{pallas_relu.1} parent=0 // pred_region
    _
  $region9: #{pallas_relu.1} parent=0 // pred_fallthru
    _
  // Predicated region
  $region10: #{pallas_relu.1} parent=0 // pred_check
    _
  $region11: #{pallas_relu.1} parent=0 // pred_check_branch
    %17 = sbr.rel (0) target = $region13
  $region12: #{pallas_relu.1} parent=0 // pred_region
    _
  $region13: #{pallas_relu.1} parent=0 // pred_fallthru
    _

</llo_original>
